<compile_context>
chip_gen: v7x
topology: tpu7x:2x2x1
jax: 0.10.0
libtpu: 0.0.40
codegen_flags: <defaults>
</compile_context>

<pallas_src>
import functools

import jax
import jax.numpy as jnp
from jax import lax
from jax.experimental import pallas as pl
from jax.experimental.pallas import tpu as pltpu


def _layernorm(v, w, b, eps=1e-5):
    mean = jnp.mean(v, axis=-1, keepdims=True)
    c = v - mean
    var = jnp.mean(c * c, axis=-1, keepdims=True)
    return c * lax.rsqrt(var + eps) * w + b


def _ffn_kernel(x_ref, xhalo_ref, state_ref, ln_w_ref, ln_b_ref, xk_mix_ref,
                wkT_ref, wvT_ref, out_ref, acc_ref, xk_ref):
    t = pl.program_id(0)
    i = pl.program_id(1)
    n_i = pl.num_programs(1)

    # ---- per-T-tile prologue: LayerNorm + token shift (only at i == 0) ------
    @pl.when(i == 0)
    def _():
        x = x_ref[...].astype(jnp.float32)          # (tT, H) raw residual
        w = ln_w_ref[...]
        b = ln_b_ref[...]
        mix = xk_mix_ref[...]
        xn = _layernorm(x, w, b)

        # Rows 1..tT-1: past row is xn[r-1] via a sublane roll (XLU, cheap).
        shifted = pltpu.roll(xn, shift=1, axis=0)
        xk = xn + (shifted - xn) * mix
        xk_ref[...] = xk.astype(xk_ref.dtype)

        # Row 0: past row is
        #   t == 0 -> external shift state
        #   t  > 0 -> LayerNorm of the raw row just before this tile
        #             (recomputed from the halo, no cross-tile dependency).
        h_rows = xhalo_ref.shape[0]
        prev = _layernorm(xhalo_ref[h_rows - 1:h_rows, :].astype(jnp.float32),
                          w, b)
        prev = jnp.where(t == 0, state_ref[...], prev)            # (1, H)
        xk0 = xn[0:1, :] + (prev - xn[0:1, :]) * mix
        xk_ref[0:1, :] = xk0.astype(xk_ref.dtype)

        acc_ref[...] = x                            # residual preloaded (f32)

    # ---- fused dual matmul over one I tile (bf16 in, f32 accumulate) --------
    # k_tile = relu(xk @ WkT[:, iI]) ** 2                         (tT, tI)
    k = jnp.dot(xk_ref[...], wkT_ref[...], preferred_element_type=jnp.float32)
    k = jnp.maximum(k, 0.0)
    k = (k * k).astype(wvT_ref.dtype)
    # acc += k_tile @ WvT[iI, :]                                  (tT, H)
    acc_ref[...] += jnp.dot(k, wvT_ref[...],
                            preferred_element_type=jnp.float32)

    # ---- epilogue: single lane-dense store per T tile ------------------------
    @pl.when(i == n_i - 1)
    def _():
        out_ref[...] = acc_ref[...].astype(out_ref.dtype)


def rwkv7_feed_forward(x, state, ln_w, ln_b, x_k, key_wT, value_wT,
                       *, block_t=512, block_i=512):
    """RWKV-7 channel-mix FFN.

    x        : (1, T, H) activations (residual stream)
    state    : (1, H)    token-shift state
    ln_w/b   : (H,)      LayerNorm affine params
    x_k      : broadcastable to (H,)
    key_wT   : (H, I)    key.weight.T   -- pre-transposed ONCE at load time
    value_wT : (I, H)    value.weight.T -- pre-transposed ONCE at load time

    key_wT / value_wT must be pre-cast (once, at load time) to bf16; the MXU
    runs bf16 with f32 accumulation.  No per-call transpose or cast happens
    here.  On v7x with large H/I, prefer block_t<=256 or block_i=256 so the
    64 MiB VMEM still fits double-buffered weight tiles.
    """
    B, T, H = x.shape
    assert B == 1, "module asserts batch_size == 1"
    I = key_wT.shape[1]
    assert key_wT.shape == (H, I) and value_wT.shape == (I, H), \
        "pass pre-transposed weights: key.weight.T (H,I), value.weight.T (I,H)"
    assert key_wT.dtype == value_wT.dtype
    w_dtype = key_wT.dtype
    assert w_dtype == jnp.bfloat16 or w_dtype == jnp.float32, \
        "weights must be pre-cast to bf16 (preferred) or f32"

    tT = min(block_t, T)
    tI = min(block_i, I)
    assert T % tT == 0 and I % tI == 0, "this kernel requires exact tiling"
    assert tI % 128 == 0 or tI == I
    nT, nI = T // tT, I // tI
    assert tT % 8 == 0 or nT == 1

    # Halo: 8 raw rows ending at the last row of the previous T tile, so each
    # tile can recompute the LayerNorm of row (t*tT - 1) locally.
    if tT % 8 == 0:
        halo_rows = 8
        bpt = tT // 8
        halo_map = lambda t, i: (jnp.maximum(t * bpt - 1, 0), 0)
    else:  # single T tile; halo never used
        halo_rows = tT
        halo_map = lambda t, i: (0, 0)

    row = lambda a: a.reshape(1, H).astype(jnp.float32)

    # Explicit VMEM budget (double-buffered inputs/outputs + scratch + prologue
    # temporaries), clamped to stay sane across generations.
    x_bytes = jnp.dtype(x.dtype).itemsize
    w_bytes = jnp.dtype(w_dtype).itemsize
    est = (2 * (tT * H * x_bytes                 # x tile
                + halo_rows * H * x_bytes        # halo rows
                + (H * tI + tI * H) * w_bytes    # weight tiles
                + tT * H * x_bytes               # out tile
                + 4 * H * 4)                     # (1,H) params
           + tT * H * 4                          # f32 accumulator scratch
           + tT * H * w_bytes                    # xk scratch
           + 3 * tT * H * 4)                     # prologue temporaries
    vmem_limit = int(min(max(est * 5 // 4, 32 * 2**20), 100 * 2**20))

    grid_spec = pltpu.PrefetchScalarGridSpec(
        num_scalar_prefetch=0,
        grid=(nT, nI),
        in_specs=[
            pl.BlockSpec((tT, H), lambda t, i: (t, 0)),       # x tile (residual)
            pl.BlockSpec((halo_rows, H), halo_map),           # raw-x halo rows
            pl.BlockSpec((1, H), lambda t, i: (0, 0)),        # shift state
            pl.BlockSpec((1, H), lambda t, i: (0, 0)),        # ln weight
            pl.BlockSpec((1, H), lambda t, i: (0, 0)),        # ln bias
            pl.BlockSpec((1, H), lambda t, i: (0, 0)),        # x_k mix
            pl.BlockSpec((H, tI), lambda t, i: (0, i)),       # key.weight.T tile
            pl.BlockSpec((tI, H), lambda t, i: (i, 0)),       # value.weight.T tile
        ],
        out_specs=pl.BlockSpec((tT, H), lambda t, i: (t, 0)),  # out
        scratch_shapes=[
            pltpu.VMEM((tT, H), jnp.float32),                 # f32 accumulator
            pltpu.VMEM((tT, H), w_dtype),                     # xk in matmul dtype
        ],
    )

    out2d = pl.pallas_call(
        _ffn_kernel,
        grid_spec=grid_spec,
        out_shape=jax.ShapeDtypeStruct((T, H), x.dtype),
        compiler_params=pltpu.CompilerParams(
            dimension_semantics=("parallel", "arbitrary"),
            vmem_limit_bytes=vmem_limit),
    )(x[0], x[0], row(state), row(ln_w), row(ln_b), row(x_k),
      key_wT, value_wT)

    # New token-shift state = LayerNorm of the last raw row.  Tiny (1,H) op,
    # done here so no extra HBM writeback / parallel-axis race in the kernel.
    xn_last = _layernorm(x[0, T - 1:T, :].astype(jnp.float32),
                         row(ln_w), row(ln_b))
    if T == 1:
        state_out = xn_last.reshape(1, 1, H).astype(x.dtype)   # matches PyTorch
    else:
        state_out = xn_last.astype(x.dtype)                     # (1, H)

    return out2d[None, :, :], state_out


def _reference(x, state, ln_w, ln_b, x_k, key_w, value_w, matmul_dtype=None):
    """Pure-JAX reference mirroring the PyTorch forward (batch == 1).

    key_w / value_w here are in the original PyTorch orientation:
    key_w (I, H), value_w (H, I).
    """
    last_x = x
    mean = jnp.mean(x, axis=-1, keepdims=True)
    var = jnp.mean((x - mean) ** 2, axis=-1, keepdims=True)
    xn = (x - mean) * lax.rsqrt(var + 1e-5) * ln_w.reshape(1, 1, -1) \
        + ln_b.reshape(1, 1, -1)
    past = jnp.concatenate([state[:, None, :], xn[:, :-1, :]], axis=1)
    xk = xn + (past - xn) * x_k.reshape(1, 1, -1)
    wk, wv = key_w, value_w
    if matmul_dtype is not None:
        xk, wk, wv = (a.astype(matmul_dtype) for a in (xk, wk, wv))
    k = jnp.maximum(jnp.einsum('bth,ih->bti', xk, wk,
                               preferred_element_type=jnp.float32), 0.0) ** 2
    if matmul_dtype is not None:
        k = k.astype(matmul_dtype)
    v = jnp.einsum('bti,hi->bth', k, wv, preferred_element_type=jnp.float32)
    return v + last_x, xn[:, -1, :]


if __name__ == "__main__":
    hidden_size = 128
    intermediate_size = 512
    seq_len = 32
    batch = 1

    key = jax.random.PRNGKey(0)
    ks = jax.random.split(key, 8)
    x = jax.random.normal(ks[0], (batch, seq_len, hidden_size), jnp.float32)
    state = jax.random.normal(ks[1], (batch, hidden_size), jnp.float32)
    ln_w = 1.0 + 0.1 * jax.random.normal(ks[2], (hidden_size,), jnp.float32)
    ln_b = 0.1 * jax.random.normal(ks[3], (hidden_size,), jnp.float32)
    x_k = jax.random.uniform(ks[4], (1, 1, hidden_size), jnp.float32)
    key_w = 0.1 * jax.random.normal(ks[5], (intermediate_size, hidden_size),
                                    jnp.float32)
    value_w = 0.1 * jax.random.normal(ks[6], (hidden_size, intermediate_size),
                                      jnp.float32)

    # One-time (load-time) transpose + cast of the big weights into
    # MXU-canonical (K, N) orientation and bf16; the jitted per-call path
    # performs no weight transpose or cast.
    key_wT = jnp.asarray(key_w.T, dtype=jnp.bfloat16)        # (H, I)
    value_wT = jnp.asarray(value_w.T, dtype=jnp.bfloat16)    # (I, H)

    # Small tiles so the demo exercises the multi-tile T (halo + parallel axis)
    # and multi-tile I (accumulator) paths: grid = (2, 2).
    ffn = jax.jit(functools.partial(rwkv7_feed_forward, block_t=16, block_i=256))
    out, state_out = ffn(x, state, ln_w, ln_b, x_k, key_wT, value_wT)
    jax.block_until_ready((out, state_out))

    # Tight check vs a reference with matched bf16 matmul numerics ...
    ref_out_bf16, ref_state = _reference(x, state, ln_w, ln_b, x_k,
                                         key_w, value_w,
                                         matmul_dtype=jnp.bfloat16)
    # ... and a loose sanity check vs the full-f32 PyTorch-equivalent math.
    ref_out_f32, _ = _reference(x, state, ln_w, ln_b, x_k, key_w, value_w)

    assert out.shape == (batch, seq_len, hidden_size)
    assert state_out.shape == (batch, hidden_size)
    assert jnp.allclose(out, ref_out_bf16, atol=5e-2, rtol=5e-2), \
        float(jnp.max(jnp.abs(out - ref_out_bf16)))
    assert jnp.allclose(out, ref_out_f32, atol=5e-1, rtol=5e-2), \
        float(jnp.max(jnp.abs(out - ref_out_f32)))
    assert jnp.allclose(state_out, ref_state, atol=1e-4, rtol=1e-4)

    print("KERNEL_OK")
</pallas_src>

<mosaic_0001>
module attributes {stable_mosaic.version = 11 : i64} {
  func.func @_ffn_kernel(%arg0: i32, %arg1: i32, %arg2: memref<16x128xf32, #tpu.memory_space<vmem>>, %arg3: memref<8x128xf32, #tpu.memory_space<vmem>>, %arg4: memref<1x128xf32, #tpu.memory_space<vmem>>, %arg5: memref<1x128xf32, #tpu.memory_space<vmem>>, %arg6: memref<1x128xf32, #tpu.memory_space<vmem>>, %arg7: memref<1x128xf32, #tpu.memory_space<vmem>>, %arg8: memref<128x256xbf16, #tpu.memory_space<vmem>>, %arg9: memref<256x128xbf16, #tpu.memory_space<vmem>>, %arg10: memref<16x128xf32, #tpu.memory_space<vmem>>, %arg11: memref<16x128xf32, #tpu.memory_space<vmem>>, %arg12: memref<16x128xbf16, #tpu.memory_space<vmem>>) attributes {dimension_semantics = [#tpu.dimension_semantics<parallel>, #tpu.dimension_semantics<arbitrary>], iteration_bounds = array<i64: 2, 2>, scalar_prefetch = 0 : i64, scratch_operands = 2 : i64, tpu.core_type = #tpu.core_type<tc>, window_params = [{transform_indices = @transform_0, window_bounds = array<i64: 16, 128>}, {transform_indices = @transform_1, window_bounds = array<i64: 8, 128>}, {pipeline_mode = #tpu.pipeline_mode<synchronous>, transform_indices = @transform_2, window_bounds = array<i64: 1, 128>}, {pipeline_mode = #tpu.pipeline_mode<synchronous>, transform_indices = @transform_3, window_bounds = array<i64: 1, 128>}, {pipeline_mode = #tpu.pipeline_mode<synchronous>, transform_indices = @transform_4, window_bounds = array<i64: 1, 128>}, {pipeline_mode = #tpu.pipeline_mode<synchronous>, transform_indices = @transform_5, window_bounds = array<i64: 1, 128>}, {transform_indices = @transform_6, window_bounds = array<i64: 128, 256>}, {transform_indices = @transform_7, window_bounds = array<i64: 256, 128>}, {transform_indices = @transform_8, window_bounds = array<i64: 16, 128>}]} {
    %c0_i32 = arith.constant 0 : i32
    %0 = arith.cmpi eq, %arg1, %c0_i32 : i32
    %1 = arith.extui %0 : i1 to i32
    %c0_i32_0 = arith.constant 0 : i32
    %2 = arith.cmpi ne, %1, %c0_i32_0 : i32
    scf.if %2 {
      %c0_13 = arith.constant 0 : index
      %c0_14 = arith.constant 0 : index
      %18 = vector.load %arg2[%c0_13, %c0_14] : memref<16x128xf32, #tpu.memory_space<vmem>>, vector<16x128xf32>
      %c0_15 = arith.constant 0 : index
      %c0_16 = arith.constant 0 : index
      %19 = vector.load %arg5[%c0_15, %c0_16] : memref<1x128xf32, #tpu.memory_space<vmem>>, vector<1x128xf32>
      %c0_17 = arith.constant 0 : index
      %c0_18 = arith.constant 0 : index
      %20 = vector.load %arg6[%c0_17, %c0_18] : memref<1x128xf32, #tpu.memory_space<vmem>>, vector<1x128xf32>
      %c0_19 = arith.constant 0 : index
      %c0_20 = arith.constant 0 : index
      %21 = vector.load %arg7[%c0_19, %c0_20] : memref<1x128xf32, #tpu.memory_space<vmem>>, vector<1x128xf32>
      %cst_21 = arith.constant dense<0.000000e+00> : vector<16xf32>
      %22 = vector.multi_reduction <add>, %18, %cst_21 [1] : vector<16x128xf32> to vector<16xf32>
      %23 = vector.shape_cast %22 : vector<16xf32> to vector<16x1xf32>
      %cst_22 = arith.constant 1.280000e+02 : f32
      %24 = vector.broadcast %cst_22 : f32 to vector<16x1xf32>
      %25 = arith.divf %23, %24 : vector<16x1xf32>
      %26 = vector.broadcast %25 : vector<16x1xf32> to vector<16x128xf32>
      %27 = arith.subf %18, %26 : vector<16x128xf32>
      %28 = arith.mulf %27, %27 : vector<16x128xf32>
      %cst_23 = arith.constant dense<0.000000e+00> : vector<16xf32>
      %29 = vector.multi_reduction <add>, %28, %cst_23 [1] : vector<16x128xf32> to vector<16xf32>
      %30 = vector.shape_cast %29 : vector<16xf32> to vector<16x1xf32>
      %cst_24 = arith.constant 1.280000e+02 : f32
      %31 = vector.broadcast %cst_24 : f32 to vector<16x1xf32>
      %32 = arith.divf %30, %31 : vector<16x1xf32>
      %cst_25 = arith.constant 9.99999974E-6 : f32
      %33 = vector.broadcast %cst_25 : f32 to vector<16x1xf32>
      %34 = arith.addf %32, %33 : vector<16x1xf32>
      %35 = math.rsqrt %34 : vector<16x1xf32>
      %36 = vector.broadcast %35 : vector<16x1xf32> to vector<16x128xf32>
      %37 = arith.mulf %27, %36 : vector<16x128xf32>
      %38 = vector.broadcast %19 : vector<1x128xf32> to vector<16x128xf32>
      %39 = arith.mulf %37, %38 : vector<16x128xf32>
      %40 = vector.broadcast %20 : vector<1x128xf32> to vector<16x128xf32>
      %41 = arith.addf %39, %40 : vector<16x128xf32>
      %c1_i32_26 = arith.constant 1 : i32
      %42 = tpu.dynamic_rotate %41 by %c1_i32_26 dim 0 : vector<16x128xf32>, i32 -> vector<16x128xf32>
      %43 = arith.subf %42, %41 : vector<16x128xf32>
      %44 = vector.broadcast %21 : vector<1x128xf32> to vector<16x128xf32>
      %45 = arith.mulf %43, %44 : vector<16x128xf32>
      %46 = arith.addf %41, %45 : vector<16x128xf32>
      %47 = arith.truncf %46 : vector<16x128xf32> to vector<16x128xbf16>
      %c0_27 = arith.constant 0 : index
      %c0_28 = arith.constant 0 : index
      %48 = vector.load %arg12[%c0_27, %c0_28] : memref<16x128xbf16, #tpu.memory_space<vmem>>, vector<16x128xbf16>
      tpu.vector_store %arg12[%c0_27, %c0_28], %47 {strides = array<i32>} : memref<16x128xbf16, #tpu.memory_space<vmem>>, vector<16x128xbf16>,
      %c7 = arith.constant 7 : index
      %c0_29 = arith.constant 0 : index
      %49 = vector.load %arg3[%c7, %c0_29] : memref<8x128xf32, #tpu.memory_space<vmem>>, vector<1x128xf32>
      %cst_30 = arith.constant dense<0.000000e+00> : vector<1xf32>
      %50 = vector.multi_reduction <add>, %49, %cst_30 [1] : vector<1x128xf32> to vector<1xf32>
      %51 = vector.shape_cast %50 : vector<1xf32> to vector<1x1xf32>
      %cst_31 = arith.constant 1.280000e+02 : f32
      %52 = vector.broadcast %cst_31 : f32 to vector<1x1xf32>
      %53 = arith.divf %51, %52 : vector<1x1xf32>
      %54 = vector.broadcast %53 : vector<1x1xf32> to vector<1x128xf32>
      %55 = arith.subf %49, %54 : vector<1x128xf32>
      %56 = arith.mulf %55, %55 : vector<1x128xf32>
      %cst_32 = arith.constant dense<0.000000e+00> : vector<1xf32>
      %57 = vector.multi_reduction <add>, %56, %cst_32 [1] : vector<1x128xf32> to vector<1xf32>
      %58 = vector.shape_cast %57 : vector<1xf32> to vector<1x1xf32>
      %cst_33 = arith.constant 1.280000e+02 : f32
      %59 = vector.broadcast %cst_33 : f32 to vector<1x1xf32>
      %60 = arith.divf %58, %59 : vector<1x1xf32>
      %cst_34 = arith.constant 9.99999974E-6 : f32
      %61 = vector.broadcast %cst_34 : f32 to vector<1x1xf32>
      %62 = arith.addf %60, %61 : vector<1x1xf32>
      %63 = math.rsqrt %62 : vector<1x1xf32>
      %64 = vector.broadcast %63 : vector<1x1xf32> to vector<1x128xf32>
      %65 = arith.mulf %55, %64 : vector<1x128xf32>
      %66 = arith.mulf %65, %19 : vector<1x128xf32>
      %67 = arith.addf %66, %20 : vector<1x128xf32>
      %c0_i32_35 = arith.constant 0 : i32
      %68 = arith.cmpi eq, %arg0, %c0_i32_35 : i32
      %c0_36 = arith.constant 0 : index
      %c0_37 = arith.constant 0 : index
      %69 = vector.load %arg4[%c0_36, %c0_37] : memref<1x128xf32, #tpu.memory_space<vmem>>, vector<1x128xf32>
      %70 = arith.select %68, %69, %67 : vector<1x128xf32>
      %71 = vector.extract_strided_slice %41 {offsets = [0, 0], sizes = [1, 128], strides = [1, 1]} : vector<16x128xf32> to vector<1x128xf32>
      %72 = vector.extract_strided_slice %41 {offsets = [0, 0], sizes = [1, 128], strides = [1, 1]} : vector<16x128xf32> to vector<1x128xf32>
      %73 = arith.subf %70, %72 : vector<1x128xf32>
      %74 = arith.mulf %73, %21 : vector<1x128xf32>
      %75 = arith.addf %71, %74 : vector<1x128xf32>
      %76 = arith.truncf %75 : vector<1x128xf32> to vector<1x128xbf16>
      %c0_38 = arith.constant 0 : index
      %c0_39 = arith.constant 0 : index
      %77 = vector.load %arg12[%c0_38, %c0_39] : memref<16x128xbf16, #tpu.memory_space<vmem>>, vector<1x128xbf16>
      tpu.vector_store %arg12[%c0_38, %c0_39], %76 {strides = array<i32>} : memref<16x128xbf16, #tpu.memory_space<vmem>>, vector<1x128xbf16>,
      %c0_40 = arith.constant 0 : index
      %c0_41 = arith.constant 0 : index
      %78 = vector.load %arg11[%c0_40, %c0_41] : memref<16x128xf32, #tpu.memory_space<vmem>>, vector<16x128xf32>
      tpu.vector_store %arg11[%c0_40, %c0_41], %18 {strides = array<i32>} : memref<16x128xf32, #tpu.memory_space<vmem>>, vector<16x128xf32>,
    } else {
    }
    %c0 = arith.constant 0 : index
    %c0_1 = arith.constant 0 : index
    %3 = vector.load %arg12[%c0, %c0_1] : memref<16x128xbf16, #tpu.memory_space<vmem>>, vector<16x128xbf16>
    %c0_2 = arith.constant 0 : index
    %c0_3 = arith.constant 0 : index
    %4 = vector.load %arg8[%c0_2, %c0_3] : memref<128x256xbf16, #tpu.memory_space<vmem>>, vector<128x256xbf16>
    %cst = arith.constant dense<0.000000e+00> : vector<16x256xf32>
    %5 = tpu.matmul %3, %4, %cst {dimension_numbers = #tpu.dot_dimension_numbers<[1], [0], [0], [1], [0, 0, 1, 1], [], []>} : vector<16x128xbf16>, vector<128x256xbf16>, vector<16x256xf32> -> vector<16x256xf32>
    %cst_4 = arith.constant 0.000000e+00 : f32
    %6 = vector.broadcast %cst_4 : f32 to vector<16x256xf32>
    %7 = arith.maximumf %5, %6 : vector<16x256xf32>
    %8 = arith.mulf %7, %7 : vector<16x256xf32>
    %9 = arith.truncf %8 : vector<16x256xf32> to vector<16x256xbf16>
    %c0_5 = arith.constant 0 : index
    %c0_6 = arith.constant 0 : index
    %10 = vector.load %arg11[%c0_5, %c0_6] : memref<16x128xf32, #tpu.memory_space<vmem>>, vector<16x128xf32>
    %c0_7 = arith.constant 0 : index
    %c0_8 = arith.constant 0 : index
    %11 = vector.load %arg9[%c0_7, %c0_8] : memref<256x128xbf16, #tpu.memory_space<vmem>>, vector<256x128xbf16>
    %cst_9 = arith.constant dense<0.000000e+00> : vector<16x128xf32>
    %12 = tpu.matmul %9, %11, %cst_9 {dimension_numbers = #tpu.dot_dimension_numbers<[1], [0], [0], [1], [0, 0, 1, 1], [], []>} : vector<16x256xbf16>, vector<256x128xbf16>, vector<16x128xf32> -> vector<16x128xf32>
    %13 = arith.addf %10, %12 : vector<16x128xf32>
    %c0_10 = arith.constant 0 : index
    %c0_11 = arith.constant 0 : index
    %14 = vector.load %arg11[%c0_10, %c0_11] : memref<16x128xf32, #tpu.memory_space<vmem>>, vector<16x128xf32>
    tpu.vector_store %arg11[%c0_10, %c0_11], %13 {strides = array<i32>} : memref<16x128xf32, #tpu.memory_space<vmem>>, vector<16x128xf32>,
    %c1_i32 = arith.constant 1 : i32
    %15 = arith.cmpi eq, %arg1, %c1_i32 : i32
    %16 = arith.extui %15 : i1 to i32
    %c0_i32_12 = arith.constant 0 : i32
    %17 = arith.cmpi ne, %16, %c0_i32_12 : i32
    scf.if %17 {
      %c0_13 = arith.constant 0 : index
      %c0_14 = arith.constant 0 : index
      %18 = vector.load %arg11[%c0_13, %c0_14] : memref<16x128xf32, #tpu.memory_space<vmem>>, vector<16x128xf32>
      %c0_15 = arith.constant 0 : index
      %c0_16 = arith.constant 0 : index
      %19 = vector.load %arg10[%c0_15, %c0_16] : memref<16x128xf32, #tpu.memory_space<vmem>>, vector<16x128xf32>
      tpu.vector_store %arg10[%c0_15, %c0_16], %18 {strides = array<i32>} : memref<16x128xf32, #tpu.memory_space<vmem>>, vector<16x128xf32>,
    } else {
    }
    return
  }
  func.func @transform_0(%arg0: i32, %arg1: i32) -> (i32, i32) {
    %c0_i32 = arith.constant 0 : i32
    %c0_i32_0 = arith.constant 0 : i32
    return %arg0, %c0_i32 : i32, i32
  }
  func.func @transform_1(%arg0: i32, %arg1: i32) -> (i32, i32) {
    %c2_i32 = arith.constant 2 : i32
    %0 = arith.muli %arg0, %c2_i32 : i32
    %c1_i32 = arith.constant 1 : i32
    %1 = arith.subi %0, %c1_i32 : i32
    %c0_i32 = arith.constant 0 : i32
    %2 = arith.maxsi %1, %c0_i32 : i32
    %c0_i32_0 = arith.constant 0 : i32
    %c0_i32_1 = arith.constant 0 : i32
    return %2, %c0_i32_0 : i32, i32
  }
  func.func @transform_2(%arg0: i32, %arg1: i32) -> (i32, i32) {
    %c0_i32 = arith.constant 0 : i32
    %c0_i32_0 = arith.constant 0 : i32
    %c0_i32_1 = arith.constant 0 : i32
    return %c0_i32, %c0_i32_0 : i32, i32
  }
  func.func @transform_3(%arg0: i32, %arg1: i32) -> (i32, i32) {
    %c0_i32 = arith.constant 0 : i32
    %c0_i32_0 = arith.constant 0 : i32
    %c0_i32_1 = arith.constant 0 : i32
    return %c0_i32, %c0_i32_0 : i32, i32
  }
  func.func @transform_4(%arg0: i32, %arg1: i32) -> (i32, i32) {
    %c0_i32 = arith.constant 0 : i32
    %c0_i32_0 = arith.constant 0 : i32
    %c0_i32_1 = arith.constant 0 : i32
    return %c0_i32, %c0_i32_0 : i32, i32
  }
  func.func @transform_5(%arg0: i32, %arg1: i32) -> (i32, i32) {
    %c0_i32 = arith.constant 0 : i32
    %c0_i32_0 = arith.constant 0 : i32
    %c0_i32_1 = arith.constant 0 : i32
    return %c0_i32, %c0_i32_0 : i32, i32
  }
  func.func @transform_6(%arg0: i32, %arg1: i32) -> (i32, i32) {
    %c0_i32 = arith.constant 0 : i32
    %c0_i32_0 = arith.constant 0 : i32
    return %c0_i32, %arg1 : i32, i32
  }
  func.func @transform_7(%arg0: i32, %arg1: i32) -> (i32, i32) {
    %c0_i32 = arith.constant 0 : i32
    %c0_i32_0 = arith.constant 0 : i32
    return %arg1, %c0_i32 : i32, i32
  }
  func.func @transform_8(%arg0: i32, %arg1: i32) -> (i32, i32) {
    %c0_i32 = arith.constant 0 : i32
    %c0_i32_0 = arith.constant 0 : i32
    return %arg0, %c0_i32 : i32, i32
  }
}

</mosaic_0001>

<llo_original>
// kernel: rwkv7_feed_forward.1
$region0: #{rwkv7_feed_forward.1}
  #allocation0 [shape = 'u32[]', space=smem, size = 0x4, offset = 0x4, fixed_abs, tag = 'smem constant byte address 0x4 - core index']
  #allocation1 [shape = 'u32[144,128]{1,0:T(1,128)}', space=vmem, size = 0x12000, scoped, tag = 'internal scratch']
  #allocation2 [shape = 'f32[16,128]{1,0:T(8,128)}', space=vmem, size = 0x2000, scoped, tag = 'scratch operand']
  #allocation3 [shape = 'bf16[16,128]{1,0:T(16,128)(2,1)}', space=vmem, size = 0x1000, scoped, tag = 'scratch operand']
  %s0 = inlined_call_operand.vmem [shape: f32[32,128], index: 0, kind: input, shape index: {}, may-alias: {0,1}]
  %s1 = inlined_call_operand.vmem [shape: f32[32,128], index: 1, kind: input, shape index: {}, may-alias: {0,1}]
  %s2 = inlined_call_operand.vmem [shape: f32[1,128], index: 2, kind: input, shape index: {}]
  %s3 = inlined_call_operand.vmem [shape: f32[1,128], index: 3, kind: input, shape index: {}]
  %s4 = inlined_call_operand.vmem [shape: f32[1,128], index: 4, kind: input, shape index: {}]
  %s5 = inlined_call_operand.vmem [shape: f32[1,128], index: 5, kind: input, shape index: {}]
  %s6 = inlined_call_operand.hbm [shape: bf16[128,512], index: 6, kind: input, shape index: {}]
  %s7 = inlined_call_operand.hbm [shape: bf16[512,128], index: 7, kind: input, shape index: {}]
  %s8 = inlined_call_operand.hbm [shape: f32[32,128], index: 8, kind: output, shape index: {}]
  %s9 = sld [smem:[#allocation0]]
  $region81: #{rwkv7_feed_forward.1} parent=0
    _
  %s11 = ssub.s32 1, %s9
  %s12 = scalar_select 0, %s11, %s9
  $region1: #{rwkv7_feed_forward.1} parent=0
    #allocation4 [shape = 'u8[131072]{0}', space=vmem, size = 0x20000, scoped, tag = 'input window, operand 6']
    #allocation5 [shape = 's32[2]{0}', space=sflag, size = 0x8, scoped, tag = 'scoped memory for rwkv7_feed_forward.1']
    #allocation6 [shape = 's32[2]{0}', space=sflag, size = 0x8, scoped, tag = 'scoped memory for rwkv7_feed_forward.1']
    #allocation7 [shape = 'u8[131072]{0}', space=vmem, size = 0x20000, scoped, tag = 'input window, operand 7']
    #allocation8 [shape = 's32[2]{0}', space=sflag, size = 0x8, scoped, tag = 'scoped memory for rwkv7_feed_forward.1']
    #allocation9 [shape = 'u8[16384]{0}', space=vmem, size = 0x4000, scoped, tag = 'output window, operand 0']
    %13 = vsyncpa [#allocation5], 0
    %s14 = scalar_lea.sflag [#allocation5], 1
    %15 = vsyncpa %s14, 0
    %16 = vsyncpa [#allocation8], 0
    %s17 = scalar_lea.sflag [#allocation8], 1
    %18 = vsyncpa %s17, 0
    %19 = vsyncpa [#allocation6], 0
    %s20 = scalar_lea.sflag [#allocation6], 1
    %21 = vsyncpa %s20, 0
    loop: start=0, step=1, limit=6
    $region2: #{rwkv7_feed_forward.1} parent=1 // loop_pre_header
      _
    $region3: #{rwkv7_feed_forward.1} parent=1 // loop_header
      %s23 = sphi 0, %s27
      %p24 = scmp.ge.s32.totalorder %s23, 6
      %s30 = sphi 0, %s42
      %s31 = sphi 0, %s38
      %s32 = sphi 0, %s30
      %s33 = sphi 0, %s31
      %s34 = sphi 0, %s32
      %s35 = sphi 0, %s33
      %s45 = sphi 0, %s47
      %s48 = sphi 0, %s45
      %s49 = sphi 0, %s48
      %s65 = sphi 0, %s49
      %s79 = sphi 0, %s81
      %s82 = sphi 0, %s79
      %s83 = sphi 0, %s82
      %s99 = sphi 0, %s83
      %s103 = sphi 0, %s103
      %s105 = sphi 0, %s103
      %s106 = sphi 0, %s105
      %s120 = sphi 0, %s106
      %s124 = sphi 0, %s124
      %s126 = sphi 0, %s124
      %s127 = sphi 0, %s126
      %s141 = sphi 0, %s127
      %s145 = sphi 0, %s145
      %s147 = sphi 0, %s145
      %s148 = sphi 0, %s147
      %s162 = sphi 0, %s148
      %s166 = sphi 0, %s166
      %s168 = sphi 0, %s166
      %s169 = sphi 0, %s168
      %s183 = sphi 0, %s169
      %s189 = sphi 0, %s191
      %s192 = sphi 0, %s189
      %s193 = sphi 0, %s192
      %s209 = sphi 0, %s193
      %s215 = sphi 0, %s217
      %s218 = sphi 0, %s215
      %s219 = sphi 0, %s218
      %s235 = sphi 0, %s219
      %s241 = sphi 0, %s243
      %s244 = sphi 0, %s241
      %s245 = sphi 0, %s244
      %s261 = sphi 0, %s245
    $region4: #{rwkv7_feed_forward.1} parent=1 // loop_header_branch
      %26 = sbr.rel (%p24) target = $region8
    $region5: #{rwkv7_feed_forward.1} parent=1 // loop_body
      %s28 = ssub.s32 %s23, 1
      %s29 = ssub.s32 %s23, 2
      %s36 = sadd.s32 1, %s31
      %p37 = scmp.ge.s32.totalorder %s36, 2
      %s38 = scalar_select %p37, 0, %s36
      %s39 = sadd.s32 1, %s30
      %s40 = scalar_select %p37, %s39, %s30
      %p41 = scmp.ge.s32.totalorder %s40, 2
      %s42 = scalar_select %p41, 0, %s40
      %s43 = ssub.s32 %s30, %s42
      %p44 = scmp.eq.s32.totalorder %s43, 0
      %s46 = sadd.s32 %s45, 1
      %s47 = scalar_select %p44, %s45, %s46
      %p50 = pneg %p44
      %p51 = scmp.eq.s32.totalorder %s23, 3
      %p52 = por %p50, %p51
      %p53 = scmp.ne.s32.totalorder %s45, %s48
      %p54 = scmp.eq.s32.totalorder %s23, 0
      %p55 = por %p53, %p54
      %p56 = scmp.ne.s32.totalorder %s45, %s48
      %p57 = scmp.eq.s32.totalorder %s28, 3
      %p58 = por %p56, %p57
      %p59 = scmp.ne.s32.totalorder %s48, %s49
      %p60 = scmp.eq.s32.totalorder %s28, 0
      %p61 = por %p59, %p60
      %p62 = scmp.ne.s32.totalorder %s48, %s49
      %p63 = scmp.eq.s32.totalorder %s29, 3
      %p64 = por %p62, %p63
      %p66 = scmp.ne.s32.totalorder %s49, %s65
      %p67 = scmp.eq.s32.totalorder %s29, 0
      %p68 = por %p66, %p67
      %s69 = smul.u32 %s30, 2
      %s70 = ssub.s32 %s69, 1
      %p71 = scmp.gt.s32.totalorder %s70, 0
      %s72 = scalar_select %p71, %s70, 0
      %s73 = smul.u32 %s42, 2
      %s74 = ssub.s32 %s73, 1
      %p75 = scmp.gt.s32.totalorder %s74, 0
      %s76 = scalar_select %p75, %s74, 0
      %s77 = ssub.s32 %s72, %s76
      %p78 = scmp.eq.s32.totalorder %s77, 0
      %s80 = sadd.s32 %s79, 1
      %s81 = scalar_select %p78, %s79, %s80
      %p84 = pneg %p78
      %p85 = scmp.eq.s32.totalorder %s23, 3
      %p86 = por %p84, %p85
      %p87 = scmp.ne.s32.totalorder %s79, %s82
      %p88 = scmp.eq.s32.totalorder %s23, 0
      %p89 = por %p87, %p88
      %p90 = scmp.ne.s32.totalorder %s79, %s82
      %p91 = scmp.eq.s32.totalorder %s28, 3
      %p92 = por %p90, %p91
      %p93 = scmp.ne.s32.totalorder %s82, %s83
      %p94 = scmp.eq.s32.totalorder %s28, 0
      %p95 = por %p93, %p94
      %p96 = scmp.ne.s32.totalorder %s82, %s83
      %p97 = scmp.eq.s32.totalorder %s29, 3
      %p98 = por %p96, %p97
      %p100 = scmp.ne.s32.totalorder %s83, %s99
      %p101 = scmp.eq.s32.totalorder %s29, 0
      %p102 = por %p100, %p101
      %s104 = sadd.s32 %s103, 1
      %p107 = scmp.eq.s32.totalorder %s23, 3
      %p108 = scmp.ne.s32.totalorder %s103, %s105
      %p109 = scmp.eq.s32.totalorder %s23, 0
      %p110 = por %p108, %p109
      %p111 = scmp.ne.s32.totalorder %s103, %s105
      %p112 = scmp.eq.s32.totalorder %s28, 3
      %p113 = por %p111, %p112
      %p114 = scmp.ne.s32.totalorder %s105, %s106
      %p115 = scmp.eq.s32.totalorder %s28, 0
      %p116 = por %p114, %p115
      %p117 = scmp.ne.s32.totalorder %s105, %s106
      %p118 = scmp.eq.s32.totalorder %s29, 3
      %p119 = por %p117, %p118
      %p121 = scmp.ne.s32.totalorder %s106, %s120
      %p122 = scmp.eq.s32.totalorder %s29, 0
      %p123 = por %p121, %p122
      %s125 = sadd.s32 %s124, 1
      %p128 = scmp.eq.s32.totalorder %s23, 3
      %p129 = scmp.ne.s32.totalorder %s124, %s126
      %p130 = scmp.eq.s32.totalorder %s23, 0
      %p131 = por %p129, %p130
      %p132 = scmp.ne.s32.totalorder %s124, %s126
      %p133 = scmp.eq.s32.totalorder %s28, 3
      %p134 = por %p132, %p133
      %p135 = scmp.ne.s32.totalorder %s126, %s127
      %p136 = scmp.eq.s32.totalorder %s28, 0
      %p137 = por %p135, %p136
      %p138 = scmp.ne.s32.totalorder %s126, %s127
      %p139 = scmp.eq.s32.totalorder %s29, 3
      %p140 = por %p138, %p139
      %p142 = scmp.ne.s32.totalorder %s127, %s141
      %p143 = scmp.eq.s32.totalorder %s29, 0
      %p144 = por %p142, %p143
      %s146 = sadd.s32 %s145, 1
      %p149 = scmp.eq.s32.totalorder %s23, 3
      %p150 = scmp.ne.s32.totalorder %s145, %s147
      %p151 = scmp.eq.s32.totalorder %s23, 0
      %p152 = por %p150, %p151
      %p153 = scmp.ne.s32.totalorder %s145, %s147
      %p154 = scmp.eq.s32.totalorder %s28, 3
      %p155 = por %p153, %p154
      %p156 = scmp.ne.s32.totalorder %s147, %s148
      %p157 = scmp.eq.s32.totalorder %s28, 0
      %p158 = por %p156, %p157
      %p159 = scmp.ne.s32.totalorder %s147, %s148
      %p160 = scmp.eq.s32.totalorder %s29, 3
      %p161 = por %p159, %p160
      %p163 = scmp.ne.s32.totalorder %s148, %s162
      %p164 = scmp.eq.s32.totalorder %s29, 0
      %p165 = por %p163, %p164
      %s167 = sadd.s32 %s166, 1
      %p170 = scmp.eq.s32.totalorder %s23, 3
      %p171 = scmp.ne.s32.totalorder %s166, %s168
      %p172 = scmp.eq.s32.totalorder %s23, 0
      %p173 = por %p171, %p172
      %p174 = scmp.ne.s32.totalorder %s166, %s168
      %p175 = scmp.eq.s32.totalorder %s28, 3
      %p176 = por %p174, %p175
      %p177 = scmp.ne.s32.totalorder %s168, %s169
      %p178 = scmp.eq.s32.totalorder %s28, 0
      %p179 = por %p177, %p178
      %p180 = scmp.ne.s32.totalorder %s168, %s169
      %p181 = scmp.eq.s32.totalorder %s29, 3
      %p182 = por %p180, %p181
      %p184 = scmp.ne.s32.totalorder %s169, %s183
      %p185 = scmp.eq.s32.totalorder %s29, 0
      %p186 = por %p184, %p185
      %s187 = ssub.s32 %s31, %s38
      %p188 = scmp.eq.s32.totalorder %s187, 0
      %s190 = sadd.s32 %s189, 1
      %s191 = scalar_select %p188, %s189, %s190
      %p194 = pneg %p188
      %p195 = scmp.eq.s32.totalorder %s23, 3
      %p196 = por %p194, %p195
      %p197 = scmp.ne.s32.totalorder %s189, %s192
      %p198 = scmp.eq.s32.totalorder %s23, 0
      %p199 = por %p197, %p198
      %p200 = scmp.ne.s32.totalorder %s189, %s192
      %p201 = scmp.eq.s32.totalorder %s28, 3
      %p202 = por %p200, %p201
      %p203 = scmp.ne.s32.totalorder %s192, %s193
      %p204 = scmp.eq.s32.totalorder %s28, 0
      %p205 = por %p203, %p204
      %p206 = scmp.ne.s32.totalorder %s192, %s193
      %p207 = scmp.eq.s32.totalorder %s29, 3
      %p208 = por %p206, %p207
      %p210 = scmp.ne.s32.totalorder %s193, %s209
      %p211 = scmp.eq.s32.totalorder %s29, 0
      %p212 = por %p210, %p211
      %s213 = ssub.s32 %s31, %s38
      %p214 = scmp.eq.s32.totalorder %s213, 0
      %s216 = sadd.s32 %s215, 1
      %s217 = scalar_select %p214, %s215, %s216
      %p220 = pneg %p214
      %p221 = scmp.eq.s32.totalorder %s23, 3
      %p222 = por %p220, %p221
      %p223 = scmp.ne.s32.totalorder %s215, %s218
      %p224 = scmp.eq.s32.totalorder %s23, 0
      %p225 = por %p223, %p224
      %p226 = scmp.ne.s32.totalorder %s215, %s218
      %p227 = scmp.eq.s32.totalorder %s28, 3
      %p228 = por %p226, %p227
      %p229 = scmp.ne.s32.totalorder %s218, %s219
      %p230 = scmp.eq.s32.totalorder %s28, 0
      %p231 = por %p229, %p230
      %p232 = scmp.ne.s32.totalorder %s218, %s219
      %p233 = scmp.eq.s32.totalorder %s29, 3
      %p234 = por %p232, %p233
      %p236 = scmp.ne.s32.totalorder %s219, %s235
      %p237 = scmp.eq.s32.totalorder %s29, 0
      %p238 = por %p236, %p237
      %s239 = ssub.s32 %s30, %s42
      %p240 = scmp.eq.s32.totalorder %s239, 0
      %s242 = sadd.s32 %s241, 1
      %s243 = scalar_select %p240, %s241, %s242
      %p246 = pneg %p240
      %p247 = scmp.eq.s32.totalorder %s23, 3
      %p248 = por %p246, %p247
      %p249 = scmp.ne.s32.totalorder %s241, %s244
      %p250 = scmp.eq.s32.totalorder %s23, 0
      %p251 = por %p249, %p250
      %p252 = scmp.ne.s32.totalorder %s241, %s244
      %p253 = scmp.eq.s32.totalorder %s28, 3
      %p254 = por %p252, %p253
      %p255 = scmp.ne.s32.totalorder %s244, %s245
      %p256 = scmp.eq.s32.totalorder %s28, 0
      %p257 = por %p255, %p256
      %p258 = scmp.ne.s32.totalorder %s244, %s245
      %p259 = scmp.eq.s32.totalorder %s29, 3
      %p260 = por %p258, %p259
      %p262 = scmp.ne.s32.totalorder %s245, %s261
      %p263 = scmp.eq.s32.totalorder %s29, 0
      %p264 = por %p262, %p263
      %p265 = scmp.le.s32.totalorder 1, %s23
      %p266 = scmp.lt.s32.totalorder %s23, 5
      %p267 = pnand %p265, %p266
      %p268 = pneg %p267
      // Predicated region
      $region9: #{rwkv7_feed_forward.1} parent=5 // pred_check
        _
      $region10: #{rwkv7_feed_forward.1} parent=5 // pred_check_branch
        %270 = sbr.rel (%p267) target = $region12
      $region11: #{rwkv7_feed_forward.1} parent=5 // pred_region
        %s271 = ssub.s32 %s23, 1
        // Predicated region
        $region13: #{rwkv7_feed_forward.1} parent=11 // pred_check
          %p272 = pneg %p116
        $region14: #{rwkv7_feed_forward.1} parent=11 // pred_check_branch
          %274 = sbr.rel (%p272) target = $region16
        $region15: #{rwkv7_feed_forward.1} parent=11 // pred_region
          _
        $region16: #{rwkv7_feed_forward.1} parent=11 // pred_fallthru
          _
        // Predicated region
        $region17: #{rwkv7_feed_forward.1} parent=11 // pred_check
          %p275 = pneg %p137
        $region18: #{rwkv7_feed_forward.1} parent=11 // pred_check_branch
          %277 = sbr.rel (%p275) target = $region20
        $region19: #{rwkv7_feed_forward.1} parent=11 // pred_region
          _
        $region20: #{rwkv7_feed_forward.1} parent=11 // pred_fallthru
          _
        // Predicated region
        $region21: #{rwkv7_feed_forward.1} parent=11 // pred_check
          %p278 = pneg %p158
        $region22: #{rwkv7_feed_forward.1} parent=11 // pred_check_branch
          %280 = sbr.rel (%p278) target = $region24
        $region23: #{rwkv7_feed_forward.1} parent=11 // pred_region
          _
        $region24: #{rwkv7_feed_forward.1} parent=11 // pred_fallthru
          _
        // Predicated region
        $region25: #{rwkv7_feed_forward.1} parent=11 // pred_check
          %p281 = pneg %p179
        $region26: #{rwkv7_feed_forward.1} parent=11 // pred_check_branch
          %283 = sbr.rel (%p281) target = $region28
        $region27: #{rwkv7_feed_forward.1} parent=11 // pred_region
          _
        $region28: #{rwkv7_feed_forward.1} parent=11 // pred_fallthru
          _
      $region12: #{rwkv7_feed_forward.1} parent=5 // pred_fallthru
        _
      %p284 = scmp.lt.s32.totalorder %s23, 4
      // Predicated region
      $region29: #{rwkv7_feed_forward.1} parent=5 // pred_check
        %p285 = pneg %p284
      $region30: #{rwkv7_feed_forward.1} parent=5 // pred_check_branch
        %287 = sbr.rel (%p285) target = $region32
      $region31: #{rwkv7_feed_forward.1} parent=5 // pred_region
        // Predicated region
        $region33: #{rwkv7_feed_forward.1} parent=31 // pred_check
          %p288 = pneg %p55
        $region34: #{rwkv7_feed_forward.1} parent=31 // pred_check_branch
          %290 = sbr.rel (%p288) target = $region36
        $region35: #{rwkv7_feed_forward.1} parent=31 // pred_region
          %s291 = smul.u32 2, %s30
          %p292 = scmp.lt.s32.totalorder %s291, 3
          %s293 = scalar_select %p292, %s291, 3
          %s294 = smul.addr %s293, 8
          %s295 = scalar_lea.vmem %s0, %s294
          %s296 = smul.u32 2, %s30
        $region36: #{rwkv7_feed_forward.1} parent=31 // pred_fallthru
          _
        // Predicated region
        $region37: #{rwkv7_feed_forward.1} parent=31 // pred_check
          %p297 = pneg %p89
        $region38: #{rwkv7_feed_forward.1} parent=31 // pred_check_branch
          %299 = sbr.rel (%p297) target = $region40
        $region39: #{rwkv7_feed_forward.1} parent=31 // pred_region
          %s300 = smul.u32 %s30, 2
          %s301 = ssub.s32 %s300, 1
          %p302 = scmp.gt.s32.totalorder %s301, 0
          %s303 = scalar_select %p302, %s301, 0
          %p304 = scmp.lt.s32.totalorder %s303, 3
          %s305 = scalar_select %p304, %s303, 3
          %s306 = smul.addr %s305, 8
          %s307 = scalar_lea.vmem %s1, %s306
          %s308 = smul.u32 %s30, 2
          %s309 = ssub.s32 %s308, 1
          %p310 = scmp.gt.s32.totalorder %s309, 0
          %s311 = scalar_select %p310, %s309, 0
        $region40: #{rwkv7_feed_forward.1} parent=31 // pred_fallthru
          _
        // Predicated region
        $region41: #{rwkv7_feed_forward.1} parent=31 // pred_check
          %p312 = pneg %p199
        $region42: #{rwkv7_feed_forward.1} parent=31 // pred_check_branch
          %314 = sbr.rel (%p312) target = $region44
        $region43: #{rwkv7_feed_forward.1} parent=31 // pred_region
          %s315 = sand.u32 %s189, 1
          %s316 = scalar_lea.sflag [#allocation5], %s315
          %s317 = sand.u32 %s189, 1
          %s318 = smul.addr %s317, 128
          %s319 = scalar_lea.vmem [#allocation4], %s318
          %s320 = smul.u32 2, %s31
          %s322 = ssub.s32 2048, 2048
          %323 = vsyncadd %s316, %s322
          %s324 = smul.addr %s320, 64
          %s325 = scalar_lea.hbm %s6, %s324
          %s326 = sshll.u32 %s319, 4
          %s327 = int_to_ptr.vmem [resolvable:$true] %s326
          %332 = dma.hbm_to_vmem [thread:$0]  %s325, 2048, %s327, %s316, 256, 128, 8
        $region44: #{rwkv7_feed_forward.1} parent=31 // pred_fallthru
          _
        // Predicated region
        $region45: #{rwkv7_feed_forward.1} parent=31 // pred_check
          %p333 = pneg %p225
        $region46: #{rwkv7_feed_forward.1} parent=31 // pred_check_branch
          %335 = sbr.rel (%p333) target = $region48
        $region47: #{rwkv7_feed_forward.1} parent=31 // pred_region
          %s336 = sand.u32 %s215, 1
          %s337 = scalar_lea.sflag [#allocation8], %s336
          %s338 = sand.u32 %s215, 1
          %s339 = smul.addr %s338, 128
          %s340 = scalar_lea.vmem [#allocation7], %s339
          %s341 = smul.u32 32, %s31
          %s343 = ssub.s32 2048, 2048
          %344 = vsyncadd %s337, %s343
          %s345 = smul.addr %s341, 64
          %s346 = scalar_lea.hbm %s7, %s345
          %s347 = sshll.u32 %s340, 4
          %s348 = int_to_ptr.vmem [resolvable:$true] %s347
          %353 = dma.hbm_to_vmem [thread:$0]  %s346, 2048, %s348, %s337, 64, 64, 4
        $region48: #{rwkv7_feed_forward.1} parent=31 // pred_fallthru
          _
      $region32: #{rwkv7_feed_forward.1} parent=5 // pred_fallthru
        _
      %p354 = scmp.le.s32.totalorder 1, %s23
      %p355 = scmp.lt.s32.totalorder %s23, 5
      %p356 = pnand %p354, %p355
      %p357 = pneg %p356
      // Predicated region
      $region49: #{rwkv7_feed_forward.1} parent=5 // pred_check
        _
      $region50: #{rwkv7_feed_forward.1} parent=5 // pred_check_branch
        %359 = sbr.rel (%p356) target = $region52
      $region51: #{rwkv7_feed_forward.1} parent=5 // pred_region
        %s360 = ssub.s32 %s23, 1
        %s361 = sand.u32 %s192, 1
        %s362 = scalar_lea.sflag [#allocation5], %s361
        %s363 = sand.u32 %s192, 1
        %s364 = smul.addr %s363, 128
        %s365 = scalar_lea.vmem [#allocation4], %s364
        // Predicated region
        $region53: #{rwkv7_feed_forward.1} parent=51 // pred_check
          %p366 = pneg %p205
        $region54: #{rwkv7_feed_forward.1} parent=51 // pred_check_branch
          %368 = sbr.rel (%p366) target = $region56
        $region55: #{rwkv7_feed_forward.1} parent=51 // pred_region
          %369 = dma.done %s362, 2048
        $region56: #{rwkv7_feed_forward.1} parent=51 // pred_fallthru
          _
        %s370 = sand.u32 %s218, 1
        %s371 = scalar_lea.sflag [#allocation8], %s370
        %s372 = sand.u32 %s218, 1
        %s373 = smul.addr %s372, 128
        %s374 = scalar_lea.vmem [#allocation7], %s373
        // Predicated region
        $region57: #{rwkv7_feed_forward.1} parent=51 // pred_check
          %p375 = pneg %p231
        $region58: #{rwkv7_feed_forward.1} parent=51 // pred_check_branch
          %377 = sbr.rel (%p375) target = $region60
        $region59: #{rwkv7_feed_forward.1} parent=51 // pred_region
          %378 = dma.done %s371, 2048
        $region60: #{rwkv7_feed_forward.1} parent=51 // pred_fallthru
          _
        %s379 = smul.u32 2, %s32
        %p380 = scmp.lt.s32.totalorder %s379, 3
        %s381 = scalar_select %p380, %s379, 3
        %s382 = smul.addr %s381, 8
        %s383 = scalar_lea.vmem %s0, %s382
        %p384 = pneg %p61
        %p385 = pneg %p58
        %s386 = smul.u32 %s32, 2
        %s387 = ssub.s32 %s386, 1
        %p388 = scmp.gt.s32.totalorder %s387, 0
        %s389 = scalar_select %p388, %s387, 0
        %p390 = scmp.lt.s32.totalorder %s389, 3
        %s391 = scalar_select %p390, %s389, 3
        %s392 = smul.addr %s391, 8
        %s393 = scalar_lea.vmem %s1, %s392
        %p394 = pneg %p95
        %p395 = pneg %p92
        %p396 = pneg %p116
        %p397 = pneg %p113
        %p398 = pneg %p137
        %p399 = pneg %p134
        %p400 = pneg %p158
        %p401 = pneg %p155
        %p402 = pneg %p179
        %p403 = pneg %p176
        %s404 = sand.u32 %s192, 1
        %s405 = scalar_lea.sflag [#allocation5], %s404
        %s406 = sand.u32 %s192, 1
        %s407 = smul.addr %s406, 128
        %s408 = scalar_lea.vmem [#allocation4], %s407
        %p409 = pneg %p205
        %p410 = pneg %p202
        %s411 = sand.u32 %s218, 1
        %s412 = scalar_lea.sflag [#allocation8], %s411
        %s413 = sand.u32 %s218, 1
        %s414 = smul.addr %s413, 128
        %s415 = scalar_lea.vmem [#allocation7], %s414
        %p416 = pneg %p231
        %p417 = pneg %p228
        %p418 = pneg %p257
        %p419 = pneg %p254
        %s420 = sand.u32 %s244, 1
        %s421 = scalar_lea.sflag [#allocation6], %s420
        %s422 = sand.u32 %s244, 1
        %s423 = smul.addr %s422, 16
        %s424 = scalar_lea.vmem [#allocation9], %s423
        %s425 = smul.u32 2, %s32
        %p426 = scmp.lt.s32.totalorder %s425, 3
        %s427 = scalar_select %p426, %s425, 3
        %s428 = smul.addr %s427, 8
        %s429 = scalar_lea.vmem %s0, %s428
        %s430 = smul.u32 2, %s32
        %s431 = smul.u32 %s32, 2
        %s432 = ssub.s32 %s431, 1
        %p433 = scmp.gt.s32.totalorder %s432, 0
        %s434 = scalar_select %p433, %s432, 0
        %p435 = scmp.lt.s32.totalorder %s434, 3
        %s436 = scalar_select %p435, %s434, 3
        %s437 = smul.addr %s436, 8
        %s438 = scalar_lea.vmem %s1, %s437
        %s439 = smul.u32 %s32, 2
        %s440 = ssub.s32 %s439, 1
        %p441 = scmp.gt.s32.totalorder %s440, 0
        %s442 = scalar_select %p441, %s440, 0
        %s443 = smul.u32 2, %s33
        %s444 = smul.u32 32, %s33
        %s445 = smul.u32 2, %s32
        %p447 = scmp.eq.s32.totalorder %s33, 0
        // Predicated region
        $region61: #{rwkv7_feed_forward.1} parent=51 // pred_check
          %p448 = pneg %p447
        $region62: #{rwkv7_feed_forward.1} parent=51 // pred_check_branch
          %450 = sbr.rel (%p448) target = $region64
        $region63: #{rwkv7_feed_forward.1} parent=51 // pred_region
          %v451 = vld [vmem:[%s429] sm:$0xff]
          %v452 = vld [vmem:[%s429 + $0x8] sm:$0xff]
          %v453 = vld [vmem:[%s3] sm:$0x1]
          %v454 = vld [vmem:[%s4] sm:$0x1]
          %v455 = vld [vmem:[%s5] sm:$0x1]
          %456 = vadd.xlane.f32.xlu0 %v451
          %v457 = vpop.xlane.xlu0 %456
          %458 = vadd.xlane.f32.xlu0 %v452
          %v459 = vpop.xlane.xlu0 %458
          %v460 = vrcp.pop 128.0
          %v461 = vmul.f32 %v457, %v460
          %v462 = vmul.f32 %v459, %v460
          %v463 = vsub.f32 %v451, %v461
          %v464 = vsub.f32 %v452, %v462
          %v465 = vmul.f32 %v463, %v463
          %v466 = vmul.f32 %v464, %v464
          %467 = vadd.xlane.f32.xlu0 %v465
          %v468 = vpop.xlane.xlu0 %467
          %469 = vadd.xlane.f32.xlu0 %v466
          %v470 = vpop.xlane.xlu0 %469
          %v471 = vmul.f32 %v468, %v460
          %v472 = vmul.f32 %v470, %v460
          %v473 = vadd.f32 %v471, 1e-05
          %v474 = vadd.f32 %v472, 1e-05
          %v475 = vrsqrt.pop %v473
          %v476 = vrsqrt.pop %v474
          %v477 = vmul.f32 %v463, %v475
          %v478 = vmul.f32 %v464, %v476
          %v480 = vlaneseq
          %v481 = vshrl.u32 %v480, 7
          %v482 = vsub.s32 0, %v481
          %v483 = vrot.slane %v453, %v482
          %v485 = vmul.f32 %v477, %v483
          %v486 = vmul.f32 %v478, %v483
          %v488 = vlaneseq
          %v489 = vshrl.u32 %v488, 7
          %v490 = vsub.s32 0, %v489
          %v491 = vrot.slane %v454, %v490
          %v493 = vadd.f32 %v485, %v491
          %v494 = vadd.f32 %v486, %v491
          %v495 = vrot.slane %v493, 7
          %v496 = vrot.slane %v494, 7
          %v497 = vlaneseq
          %v498 = vshrl.u32 %v497, 7
          %vm499 = vcmp.lt.s32.totalorder %v498, 1
          %v500 = vsel %vm499, %v495, %v496
          %v501 = vsel %vm499, %v496, %v495
          %v502 = vsub.f32 %v501, %v493
          %v503 = vsub.f32 %v500, %v494
          %v505 = vlaneseq
          %v506 = vshrl.u32 %v505, 7
          %v507 = vsub.s32 0, %v506
          %v508 = vrot.slane %v455, %v507
          %v510 = vmul.f32 %v502, %v508
          %v511 = vmul.f32 %v503, %v508
          %v512 = vadd.f32 %v493, %v510
          %v513 = vadd.f32 %v494, %v511
          %v514 = vpack.c.bf16 %v513, %v512
          %515 = vst [vmem:[#allocation3] sm:$0xff] %v514
          %v516 = vld [vmem:[%s438 + $0x7] sm:$0x1]
          %vm517 = vcmask 1040384
          %v518 = vsel %vm517, %v516, 0.0
          %519 = vadd.xlane.f32.xlu0 %v518
          %v520 = vpop.xlane.xlu0 %519
          %v521 = vmul.f32 %v520, %v460
          %v522 = vsub.f32 %v516, %v521
          %v523 = vmul.f32 %v522, %v522
          %v524 = vsel %vm517, %v523, 0.0
          %525 = vadd.xlane.f32.xlu0 %v524
          %v526 = vpop.xlane.xlu0 %525
          %v527 = vmul.f32 %v526, %v460
          %v528 = vadd.f32 %v527, 1e-05
          %v529 = vrsqrt.pop %v528
          %v530 = vmul.f32 %v522, %v529
          %v531 = vmul.f32 %v530, %v453
          %v532 = vadd.f32 %v531, %v454
          %p533 = scmp.eq.s32.totalorder %s32, 0
          %v534 = vld [vmem:[%s2] sm:$0x1]
          %s535 = scalar_select %p533, 1, 0
          %v536 = vstv %s535
          %vm537 = vcmp.eq.s32.totalorder %v536, 1
          %v538 = vsel %vm537, %v534, %v532
          %v539 = vsub.f32 %v538, %v493
          %v540 = vmul.f32 %v539, %v455
          %v541 = vadd.f32 %v493, %v540
          %v542 = vpack.c.bf16 %v541, %v541
          %vm543 = vcmask 1040384
          %vm544 = vsmask.f32 256
          %vm545 = vmand %vm543, %vm544
          %v546 = vld [vmem:[#allocation3] sm:$0x1]
          %v547 = vsel %vm545, %v542, %v546
          %548 = vst [vmem:[#allocation3] sm:$0x1] %v547
          %549 = vst [vmem:[#allocation2] sm:$0xff] %v451
          %550 = vst [vmem:[#allocation2 + $0x8] sm:$0xff] %v452
        $region64: #{rwkv7_feed_forward.1} parent=51 // pred_fallthru
          _
        %v551 = vld [vmem:[#allocation3] sm:$0xff]
        %v552 = vld [vmem:[%s365] sm:$0xff]
        %v553 = vld [vmem:[%s365 + $0x8] sm:$0xff]
        %v554 = vld [vmem:[%s365 + $0x10] sm:$0xff]
        %v555 = vld [vmem:[%s365 + $0x18] sm:$0xff]
        %v556 = vld [vmem:[%s365 + $0x20] sm:$0xff]
        %v557 = vld [vmem:[%s365 + $0x28] sm:$0xff]
        %v558 = vld [vmem:[%s365 + $0x30] sm:$0xff]
        %v559 = vld [vmem:[%s365 + $0x38] sm:$0xff]
        %v560 = vld [vmem:[%s365 + $0x40] sm:$0xff]
        %v561 = vld [vmem:[%s365 + $0x48] sm:$0xff]
        %v562 = vld [vmem:[%s365 + $0x50] sm:$0xff]
        %v563 = vld [vmem:[%s365 + $0x58] sm:$0xff]
        %v564 = vld [vmem:[%s365 + $0x60] sm:$0xff]
        %v565 = vld [vmem:[%s365 + $0x68] sm:$0xff]
        %v566 = vld [vmem:[%s365 + $0x70] sm:$0xff]
        %v567 = vld [vmem:[%s365 + $0x78] sm:$0xff]
        %v584 = vunpack.c.l.b16 %v552
        %v585 = vunpack.c.h.b16 %v552
        %v586 = vunpack.c.l.b16 %v553
        %v587 = vunpack.c.h.b16 %v553
        %v588 = vunpack.c.l.b16 %v554
        %v589 = vunpack.c.h.b16 %v554
        %v590 = vunpack.c.l.b16 %v555
        %v591 = vunpack.c.h.b16 %v555
        %v592 = vunpack.c.l.b16 %v556
        %v593 = vunpack.c.h.b16 %v556
        %v594 = vunpack.c.l.b16 %v557
        %v595 = vunpack.c.h.b16 %v557
        %v596 = vunpack.c.l.b16 %v558
        %v597 = vunpack.c.h.b16 %v558
        %v598 = vunpack.c.l.b16 %v559
        %v599 = vunpack.c.h.b16 %v559
        %v600 = vunpack.c.l.b16 %v560
        %v601 = vunpack.c.h.b16 %v560
        %v602 = vunpack.c.l.b16 %v561
        %v603 = vunpack.c.h.b16 %v561
        %v604 = vunpack.c.l.b16 %v562
        %v605 = vunpack.c.h.b16 %v562
        %v606 = vunpack.c.l.b16 %v563
        %v607 = vunpack.c.h.b16 %v563
        %v608 = vunpack.c.l.b16 %v564
        %v609 = vunpack.c.h.b16 %v564
        %v610 = vunpack.c.l.b16 %v565
        %v611 = vunpack.c.h.b16 %v565
        %v612 = vunpack.c.l.b16 %v566
        %v613 = vunpack.c.h.b16 %v566
        %v614 = vunpack.c.l.b16 %v567
        %v615 = vunpack.c.h.b16 %v567
        %v616 = vpack.c.b16 %v586, %v584
        %v617 = vpack.c.b16 %v587, %v585
        %v618 = vpack.c.b16 %v590, %v588
        %v619 = vpack.c.b16 %v591, %v589
        %v620 = vpack.c.b16 %v594, %v592
        %v621 = vpack.c.b16 %v595, %v593
        %v622 = vpack.c.b16 %v598, %v596
        %v623 = vpack.c.b16 %v599, %v597
        %v624 = vpack.c.b16 %v602, %v600
        %v625 = vpack.c.b16 %v603, %v601
        %v626 = vpack.c.b16 %v606, %v604
        %v627 = vpack.c.b16 %v607, %v605
        %v628 = vpack.c.b16 %v610, %v608
        %v629 = vpack.c.b16 %v611, %v609
        %v630 = vpack.c.b16 %v614, %v612
        %v631 = vpack.c.b16 %v615, %v613
        %648 = vmatprep.subr.bf16.mxu0 %v617
        %649 = vmatpush1.bf16.msra.mxu0 %v616
        %650 = vmatprep.subr.bf16.mxu0 %v619
        %651 = vmatpush1.bf16.msra.mxu0 %v618
        %652 = vmatprep.subr.bf16.mxu0 %v621
        %653 = vmatpush1.bf16.msra.mxu0 %v620
        %654 = vmatprep.subr.bf16.mxu0 %v623
        %655 = vmatpush1.bf16.msra.mxu0 %v622
        %656 = vmatprep.subr.bf16.mxu0 %v625
        %657 = vmatpush1.bf16.msra.mxu0 %v624
        %658 = vmatprep.subr.bf16.mxu0 %v627
        %659 = vmatpush1.bf16.msra.mxu0 %v626
        %660 = vmatprep.subr.bf16.mxu0 %v629
        %661 = vmatpush1.bf16.msra.mxu0 %v628
        %662 = vmatprep.subr.bf16.mxu0 %v631
        %663 = vmatpush1.bf16.msra.mxu0 %v630
        %664 = vmatprep.subr.bf16.mxu0 0
        %665 = vmatpush1.bf16.msra.mxu0 0
        %666 = vmatprep.subr.bf16.mxu0 0
        %667 = vmatpush1.bf16.msra.mxu0 0
        %668 = vmatprep.subr.bf16.mxu0 0
        %669 = vmatpush1.bf16.msra.mxu0 0
        %670 = vmatprep.subr.bf16.mxu0 0
        %671 = vmatpush1.bf16.msra.mxu0 0
        %672 = vmatprep.subr.bf16.mxu0 0
        %673 = vmatpush1.bf16.msra.mxu0 0
        %674 = vmatprep.subr.bf16.mxu0 0
        %675 = vmatpush1.bf16.msra.mxu0 0
        %676 = vmatprep.subr.bf16.mxu0 0
        %677 = vmatpush1.bf16.msra.mxu0 0
        %678 = vmatprep.subr.bf16.mxu0 0
        %679 = vmatpush1.bf16.msra.mxu0 0
        %680 = vmatprep.mubr.bf16.mxu0 0
        %681 = vmatmul.mubr.bf16.gmra.mrb[0].mxu0 %v551
        %v682 = vpop.f32.mrb[0].mxu0
        %v683 = vadd.f32 0.0, %v682
        %v684 = vpop.f32.mrb[0].mxu0
        %v685 = vadd.f32 0.0, %v684
        %v686 = vpop.f32.mrb[0].mxu0
        %v687 = vadd.f32 0.0, %v686
        %v688 = vpop.f32.mrb[0].mxu0
        %v689 = vadd.f32 0.0, %v688
        %690 = vdwg.mxu0
        %v691 = vmax.f32 %v683, 0.0
        %v692 = vmax.f32 %v685, 0.0
        %v693 = vmax.f32 %v687, 0.0
        %v694 = vmax.f32 %v689, 0.0
        %v695 = vmul.f32 %v691, %v691
        %v696 = vmul.f32 %v692, %v692
        %v697 = vmul.f32 %v693, %v693
        %v698 = vmul.f32 %v694, %v694
        %v699 = vpack.c.bf16 %v697, %v695
        %v700 = vpack.c.bf16 %v698, %v696
        %v701 = vld [vmem:[#allocation2] sm:$0xff]
        %v702 = vld [vmem:[#allocation2 + $0x8] sm:$0xff]
        %v703 = vld [vmem:[%s374] sm:$0xf]
        %v704 = vld [vmem:[%s374 + $0x4] sm:$0xf]
        %v705 = vld [vmem:[%s374 + $0x8] sm:$0xf]
        %v706 = vld [vmem:[%s374 + $0xc] sm:$0xf]
        %v707 = vld [vmem:[%s374 + $0x10] sm:$0xf]
        %v708 = vld [vmem:[%s374 + $0x14] sm:$0xf]
        %v709 = vld [vmem:[%s374 + $0x18] sm:$0xf]
        %v710 = vld [vmem:[%s374 + $0x1c] sm:$0xf]
        %v711 = vld [vmem:[%s374 + $0x20] sm:$0xf]
        %v712 = vld [vmem:[%s374 + $0x24] sm:$0xf]
        %v713 = vld [vmem:[%s374 + $0x28] sm:$0xf]
        %v714 = vld [vmem:[%s374 + $0x2c] sm:$0xf]
        %v715 = vld [vmem:[%s374 + $0x30] sm:$0xf]
        %v716 = vld [vmem:[%s374 + $0x34] sm:$0xf]
        %v717 = vld [vmem:[%s374 + $0x38] sm:$0xf]
        %v718 = vld [vmem:[%s374 + $0x3c] sm:$0xf]
        %v719 = vld [vmem:[%s374 + $0x40] sm:$0xf]
        %v720 = vld [vmem:[%s374 + $0x44] sm:$0xf]
        %v721 = vld [vmem:[%s374 + $0x48] sm:$0xf]
        %v722 = vld [vmem:[%s374 + $0x4c] sm:$0xf]
        %v723 = vld [vmem:[%s374 + $0x50] sm:$0xf]
        %v724 = vld [vmem:[%s374 + $0x54] sm:$0xf]
        %v725 = vld [vmem:[%s374 + $0x58] sm:$0xf]
        %v726 = vld [vmem:[%s374 + $0x5c] sm:$0xf]
        %v727 = vld [vmem:[%s374 + $0x60] sm:$0xf]
        %v728 = vld [vmem:[%s374 + $0x64] sm:$0xf]
        %v729 = vld [vmem:[%s374 + $0x68] sm:$0xf]
        %v730 = vld [vmem:[%s374 + $0x6c] sm:$0xf]
        %v731 = vld [vmem:[%s374 + $0x70] sm:$0xf]
        %v732 = vld [vmem:[%s374 + $0x74] sm:$0xf]
        %v733 = vld [vmem:[%s374 + $0x78] sm:$0xf]
        %v734 = vld [vmem:[%s374 + $0x7c] sm:$0xf]
        %v767 = vunpack.c.l.b16 %v703
        %v768 = vunpack.c.l.b16 %v704
        %v769 = vunpack.c.l.b16 %v705
        %v770 = vunpack.c.l.b16 %v706
        %v771 = vunpack.c.l.b16 %v707
        %v772 = vunpack.c.l.b16 %v708
        %v773 = vunpack.c.l.b16 %v709
        %v774 = vunpack.c.l.b16 %v710
        %v775 = vunpack.c.l.b16 %v711
        %v776 = vunpack.c.l.b16 %v712
        %v777 = vunpack.c.l.b16 %v713
        %v778 = vunpack.c.l.b16 %v714
        %v779 = vunpack.c.l.b16 %v715
        %v780 = vunpack.c.l.b16 %v716
        %v781 = vunpack.c.l.b16 %v717
        %v782 = vunpack.c.l.b16 %v718
        %v783 = vunpack.c.l.b16 %v719
        %v784 = vunpack.c.l.b16 %v720
        %v785 = vunpack.c.l.b16 %v721
        %v786 = vunpack.c.l.b16 %v722
        %v787 = vunpack.c.l.b16 %v723
        %v788 = vunpack.c.l.b16 %v724
        %v789 = vunpack.c.l.b16 %v725
        %v790 = vunpack.c.l.b16 %v726
        %v791 = vunpack.c.l.b16 %v727
        %v792 = vunpack.c.l.b16 %v728
        %v793 = vunpack.c.l.b16 %v729
        %v794 = vunpack.c.l.b16 %v730
        %v795 = vunpack.c.l.b16 %v731
        %v796 = vunpack.c.l.b16 %v732
        %v797 = vunpack.c.l.b16 %v733
        %v798 = vunpack.c.l.b16 %v734
        %v799 = vpack.c.b16 %v768, %v767
        %v800 = vpack.c.b16 %v770, %v769
        %v801 = vpack.c.b16 %v772, %v771
        %v802 = vpack.c.b16 %v774, %v773
        %v803 = vpack.c.b16 %v776, %v775
        %v804 = vpack.c.b16 %v778, %v777
        %v805 = vpack.c.b16 %v780, %v779
        %v806 = vpack.c.b16 %v782, %v781
        %v807 = vpack.c.b16 %v784, %v783
        %v808 = vpack.c.b16 %v786, %v785
        %v809 = vpack.c.b16 %v788, %v787
        %v810 = vpack.c.b16 %v790, %v789
        %v811 = vpack.c.b16 %v792, %v791
        %v812 = vpack.c.b16 %v794, %v793
        %v813 = vpack.c.b16 %v796, %v795
        %v814 = vpack.c.b16 %v798, %v797
        %831 = vmatprep.subr.bf16.mxu0 0
        %832 = vmatpush1.bf16.msra.mxu0 %v799
        %833 = vmatprep.subr.bf16.mxu0 0
        %834 = vmatpush1.bf16.msra.mxu0 %v800
        %835 = vmatprep.subr.bf16.mxu0 0
        %836 = vmatpush1.bf16.msra.mxu0 %v801
        %837 = vmatprep.subr.bf16.mxu0 0
        %838 = vmatpush1.bf16.msra.mxu0 %v802
        %839 = vmatprep.subr.bf16.mxu0 0
        %840 = vmatpush1.bf16.msra.mxu0 %v803
        %841 = vmatprep.subr.bf16.mxu0 0
        %842 = vmatpush1.bf16.msra.mxu0 %v804
        %843 = vmatprep.subr.bf16.mxu0 0
        %844 = vmatpush1.bf16.msra.mxu0 %v805
        %845 = vmatprep.subr.bf16.mxu0 0
        %846 = vmatpush1.bf16.msra.mxu0 %v806
        %847 = vmatprep.subr.bf16.mxu0 0
        %848 = vmatpush1.bf16.msra.mxu0 %v807
        %849 = vmatprep.subr.bf16.mxu0 0
        %850 = vmatpush1.bf16.msra.mxu0 %v808
        %851 = vmatprep.subr.bf16.mxu0 0
        %852 = vmatpush1.bf16.msra.mxu0 %v809
        %853 = vmatprep.subr.bf16.mxu0 0
        %854 = vmatpush1.bf16.msra.mxu0 %v810
        %855 = vmatprep.subr.bf16.mxu0 0
        %856 = vmatpush1.bf16.msra.mxu0 %v811
        %857 = vmatprep.subr.bf16.mxu0 0
        %858 = vmatpush1.bf16.msra.mxu0 %v812
        %859 = vmatprep.subr.bf16.mxu0 0
        %860 = vmatpush1.bf16.msra.mxu0 %v813
        %861 = vmatprep.subr.bf16.mxu0 0
        %862 = vmatpush1.bf16.msra.mxu0 %v814
        %863 = vmatprep.mubr.bf16.mxu0 %v700
        %864 = vmatmul.mubr.bf16.gmra.mrb[0].mxu0 %v699
        %v865 = vpop.f32.mrb[0].mxu0
        %v866 = vadd.f32 0.0, %v865
        %v867 = vpop.f32.mrb[0].mxu0
        %v868 = vpop.f32.mrb[0].mxu0
        %v869 = vadd.f32 0.0, %v868
        %v870 = vpop.f32.mrb[0].mxu0
        %871 = vdwg.mxu0
        %v872 = vadd.f32 %v701, %v866
        %v873 = vadd.f32 %v702, %v869
        %874 = vst [vmem:[#allocation2] sm:$0xff] %v872
        %875 = vst [vmem:[#allocation2 + $0x8] sm:$0xff] %v873
        %p876 = scmp.eq.s32.totalorder %s33, 1
        // Predicated region
        $region65: #{rwkv7_feed_forward.1} parent=51 // pred_check
          %p877 = pneg %p876
        $region66: #{rwkv7_feed_forward.1} parent=51 // pred_check_branch
          %879 = sbr.rel (%p877) target = $region68
        $region67: #{rwkv7_feed_forward.1} parent=51 // pred_region
          %v880 = vld [vmem:[#allocation2] sm:$0xff]
          %v881 = vld [vmem:[#allocation2 + $0x8] sm:$0xff]
          %882 = vst [vmem:[%s424] sm:$0xff] %v880
          %883 = vst [vmem:[%s424 + $0x8] sm:$0xff] %v881
        $region68: #{rwkv7_feed_forward.1} parent=51 // pred_fallthru
          _
        %s884 = sand.u32 %s244, 1
        %s885 = scalar_lea.sflag [#allocation6], %s884
        %s886 = sand.u32 %s244, 1
        %s887 = smul.addr %s886, 16
        %s888 = scalar_lea.vmem [#allocation9], %s887
        // Predicated region
        $region69: #{rwkv7_feed_forward.1} parent=51 // pred_check
          %p889 = pneg %p254
        $region70: #{rwkv7_feed_forward.1} parent=51 // pred_check_branch
          %891 = sbr.rel (%p889) target = $region72
        $region71: #{rwkv7_feed_forward.1} parent=51 // pred_region
          %s892 = smul.u32 2, %s32
          %s894 = ssub.s32 256, 256
          %895 = vsyncadd %s885, %s894
          %s896 = smul.addr %s892, 128
          %s897 = scalar_lea.hbm %s8, %s896
          %s898 = sshll.u32 %s888, 4
          %s899 = int_to_ptr.vmem [resolvable:$true] %s898
          %904 = dma.vmem_to_hbm [thread:$0]  %s899, 256, %s897, %s885, 128, 128, 8
        $region72: #{rwkv7_feed_forward.1} parent=51 // pred_fallthru
          _
      $region52: #{rwkv7_feed_forward.1} parent=5 // pred_fallthru
        _
      %p905 = scmp.le.s32.totalorder 2, %s23
      // Predicated region
      $region73: #{rwkv7_feed_forward.1} parent=5 // pred_check
        %p906 = pneg %p905
      $region74: #{rwkv7_feed_forward.1} parent=5 // pred_check_branch
        %908 = sbr.rel (%p906) target = $region76
      $region75: #{rwkv7_feed_forward.1} parent=5 // pred_region
        %s909 = ssub.s32 %s23, 2
        // Predicated region
        $region77: #{rwkv7_feed_forward.1} parent=75 // pred_check
          %p910 = pneg %p260
        $region78: #{rwkv7_feed_forward.1} parent=75 // pred_check_branch
          %912 = sbr.rel (%p910) target = $region80
        $region79: #{rwkv7_feed_forward.1} parent=75 // pred_region
          %s913 = sand.u32 %s245, 1
          %s914 = scalar_lea.sflag [#allocation6], %s913
          %s915 = sand.u32 %s245, 1
          %s916 = smul.addr %s915, 16
          %s917 = scalar_lea.vmem [#allocation9], %s916
          %918 = dma.done %s914, 256
        $region80: #{rwkv7_feed_forward.1} parent=75 // pred_fallthru
          _
      $region76: #{rwkv7_feed_forward.1} parent=5 // pred_fallthru
        _
    $region6: #{rwkv7_feed_forward.1} parent=1 // loop_footer
      %s27 = sadd.s32 1, %s23
    $region7: #{rwkv7_feed_forward.1} parent=1 // loop_footer_branch
      %22 = sbr.rel target = $region3
    $region8: #{rwkv7_feed_forward.1} parent=1 // loop_exit
      _
    %919 = vsyncpa [#allocation5], 1
    %s920 = scalar_lea.sflag [#allocation5], 1
    %921 = vsyncpa %s920, 1
    %922 = vsyncpa [#allocation8], 1
    %s923 = scalar_lea.sflag [#allocation8], 1
    %924 = vsyncpa %s923, 1
    %925 = vsyncpa [#allocation6], 1
    %s926 = scalar_lea.sflag [#allocation6], 1
    %927 = vsyncpa %s926, 1

</llo_original>
